<compile_context>
chip_gen: v5e
topology: v5e:2x2
jax: 0.10.0
libtpu: 0.0.40
codegen_flags: <defaults>
</compile_context>

<pallas_src>
import functools

import jax
import jax.numpy as jnp
from jax.experimental import pallas as pl
from jax.experimental.pallas import tpu as pltpu

LN_EPS = 1e-5  # nn.LayerNorm default


def _round_up(x, m):
    return ((x + m - 1) // m) * m


def _layernorm_rows_f32(x):
    """Row-local LayerNorm (no affine), stats in f32, biased variance."""
    x32 = x.astype(jnp.float32)
    d = x32.shape[-1]
    mean = jnp.sum(x32, axis=-1, keepdims=True) * (1.0 / d)
    xc = x32 - mean
    var = jnp.sum(xc * xc, axis=-1, keepdims=True) * (1.0 / d)
    return xc * jax.lax.rsqrt(var + LN_EPS)


def _kernel_single(x_ref, w_ref, b_ref, o_ref):
    """tn == D: LayerNorm feeds the MXU directly, no scratch round-trip."""
    normed = _layernorm_rows_f32(x_ref[...]).astype(x_ref.dtype)      # (tm, D)
    y = jnp.dot(normed, w_ref[...], preferred_element_type=jnp.float32)
    o_ref[...] = (y + b_ref[...].astype(jnp.float32)).astype(o_ref.dtype)


def _kernel_tiled(x_ref, w_ref, b_ref, o_ref, normed_ref):
    """Grid step (i, j): row tile i x output-feature tile j.

    j == 0 computes LayerNorm(x) once for the row tile and caches it in VMEM
    (the x block index is constant over j, so Pallas does not re-DMA x either).
    Every j runs (tm, D) @ (D, tn) on the MXU with an f32 accumulator.
    Correctness relies on j being the last (sequential) grid axis.
    """
    j = pl.program_id(1)

    @pl.when(j == 0)
    def _():
        normed_ref[...] = _layernorm_rows_f32(x_ref[...]).astype(normed_ref.dtype)

    y = jnp.dot(normed_ref[...], w_ref[...], preferred_element_type=jnp.float32)
    o_ref[...] = (y + b_ref[...].astype(jnp.float32)).astype(o_ref.dtype)


def _vmem_budget_bytes():
    """(vmem_limit_bytes, planning_budget_bytes), generation-aware."""
    capacity = 64 * 1024 * 1024  # conservative fallback = v7x per-TC VMEM
    try:
        info = pltpu.get_tpu_info()
        cap = getattr(info, "vmem_capacity_bytes", None)
        if cap:
            capacity = int(cap)
    except Exception:
        pass
    vmem_limit = int(capacity * 0.85)       # headroom for compiler scratch/sems
    plan_budget = int(vmem_limit * 0.85)    # headroom for accounting slack
    return vmem_limit, plan_budget


def _choose_tiles(rows, d, itemsize, budget_bytes, tile_rows_hint):
    """Pick (tm, tn): prefer resident W (tn == D), then the largest tm."""
    row_align = 16 if itemsize <= 2 else 8
    rows_aligned = _round_up(max(rows, 1), row_align)
    desired_tm = max(row_align,
                     min(_round_up(tile_rows_hint, row_align), rows_aligned))

    tn_candidates = [d]                      # full D first -> W VMEM-resident
    for c in (512, 256, 128):
        if c < d and d % c == 0:
            tn_candidates.append(c)

    def footprint(tm, tn):
        n_tiles = d // tn
        f = 2 * tm * d * itemsize            # x tile, double-buffered
        f += 2 * d * tn * itemsize           # W tile, double-buffered
        f += 2 * tn * itemsize               # bias tile
        f += 2 * tm * tn * itemsize          # out tile, double-buffered
        if n_tiles > 1:
            f += tm * d * itemsize           # cached LayerNorm(x) scratch
        return f

    def max_tm_for(tn):
        tm = desired_tm
        while tm > row_align and footprint(tm, tn) > budget_bytes:
            tm -= row_align
        return tm if footprint(tm, tn) <= budget_bytes else 0

    best = None
    for tn in tn_candidates:
        tm = max_tm_for(tn)
        if tm >= desired_tm:
            return tm, tn                    # full desired row tile fits
        if tm > 0 and (best is None or tm > best[0]):
            best = (tm, tn)
    if best is not None:
        return best
    return row_align, tn_candidates[-1]      # last resort: minimal tiles


@functools.partial(jax.jit, static_argnames=("tile_rows",))
def prenorm_linear(x, gamma, beta, w, b, *, tile_rows=512):
    """x: (B, S, D).  Returns fn(LayerNorm(x)) with fn = Linear(D, D)."""
    B, S, D = x.shape
    rows = B * S
    x2 = x.reshape(rows, D)

    # Fold the LayerNorm affine into the projection (done in f32, cast back).
    # In production, fold once at parameter-load time instead of per call.
    w32 = w.astype(jnp.float32)
    w_folded = (gamma.astype(jnp.float32)[:, None] * w32).astype(w.dtype)
    b_folded = (beta.astype(jnp.float32) @ w32
                + b.astype(jnp.float32)).astype(b.dtype).reshape(1, D)

    vmem_limit, plan_budget = _vmem_budget_bytes()
    tm, tn = _choose_tiles(rows, D, jnp.dtype(x.dtype).itemsize,
                           plan_budget, tile_rows)
    n_tiles = D // tn
    grid = (pl.cdiv(rows, tm), n_tiles)      # boundary row tile is masked

    multi = n_tiles > 1
    kernel = _kernel_tiled if multi else _kernel_single
    scratch_shapes = [pltpu.VMEM((tm, D), x.dtype)] if multi else []

    out = pl.pallas_call(
        kernel,
        out_shape=jax.ShapeDtypeStruct((rows, D), x.dtype),
        grid_spec=pltpu.PrefetchScalarGridSpec(
            num_scalar_prefetch=0,
            grid=grid,
            in_specs=[
                # x block index constant over j -> fetched once per row tile.
                pl.BlockSpec((tm, D), lambda i, j: (i, 0)),    # x rows
                pl.BlockSpec((D, tn), lambda i, j: (0, j)),    # folded W tile
                pl.BlockSpec((1, tn), lambda i, j: (0, j)),    # folded bias
            ],
            out_specs=pl.BlockSpec((tm, tn), lambda i, j: (i, j)),
            scratch_shapes=scratch_shapes,
        ),
        compiler_params=pltpu.CompilerParams(
            # Rows may split across TensorCores; the N axis carries the cached
            # normed tile (when tiled), so it must stay sequential per core.
            dimension_semantics=("parallel", "arbitrary"),
            vmem_limit_bytes=vmem_limit,
        ),
    )(x2, w_folded, b_folded)

    return out.reshape(B, S, D)


def reference(x, gamma, beta, w, b):
    """Pure-JAX reference: fn(LayerNorm(x)), statistics in f32."""
    x32 = x.astype(jnp.float32)
    mean = jnp.mean(x32, axis=-1, keepdims=True)
    var = jnp.mean((x32 - mean) ** 2, axis=-1, keepdims=True)
    normed = ((x32 - mean) * jax.lax.rsqrt(var + LN_EPS)
              * gamma.astype(jnp.float32) + beta.astype(jnp.float32))
    y = normed @ w.astype(jnp.float32) + b.astype(jnp.float32)
    return y.astype(x.dtype)


if __name__ == "__main__":
    key = jax.random.PRNGKey(0)
    B, S, D = 2, 8, 32
    k_x, k_g, k_b, k_w, k_bias = jax.random.split(key, 5)

    x = jax.random.normal(k_x, (B, S, D), dtype=jnp.float32)
    # nn.LayerNorm defaults are gamma=1, beta=0; perturb so the affine is used.
    gamma = 1.0 + 0.1 * jax.random.normal(k_g, (D,), dtype=jnp.float32)
    beta = 0.1 * jax.random.normal(k_b, (D,), dtype=jnp.float32)
    # fn = Linear(D, D)
    w = jax.random.normal(k_w, (D, D), dtype=jnp.float32) / jnp.sqrt(D)
    b = 0.1 * jax.random.normal(k_bias, (D,), dtype=jnp.float32)

    # f32 path: tight check against the pure-JAX reference.
    out = jax.block_until_ready(prenorm_linear(x, gamma, beta, w, b))
    ref = reference(x, gamma, beta, w, b)
    assert out.shape == (B, S, D)
    assert jnp.allclose(out, ref, atol=1e-4, rtol=1e-4), "f32 mismatch vs reference"

    # Uneven-rows path: rows % tm != 0 exercises the masked boundary tile
    # (no host-side pad / slice anymore).
    Bu, Su = 3, 5
    xu = jax.random.normal(k_x, (Bu, Su, D), dtype=jnp.float32)
    out_u = jax.block_until_ready(
        prenorm_linear(xu, gamma, beta, w, b, tile_rows=8))
    ref_u = reference(xu, gamma, beta, w, b)
    assert out_u.shape == (Bu, Su, D)
    assert jnp.allclose(out_u, ref_u, atol=1e-4, rtol=1e-4), \
        "uneven-rows mismatch vs reference"

    # bf16 path (bf16-native MXU operands): loose check against the f32 math.
    xb = x.astype(jnp.bfloat16)
    wb = w.astype(jnp.bfloat16)
    gb = gamma.astype(jnp.bfloat16)
    bb = beta.astype(jnp.bfloat16)
    biasb = b.astype(jnp.bfloat16)
    out_bf16 = jax.block_until_ready(prenorm_linear(xb, gb, bb, wb, biasb))
    ref_bf16 = reference(xb, gb, bb, wb, biasb).astype(jnp.float32)
    assert out_bf16.dtype == jnp.bfloat16
    assert out_bf16.shape == (B, S, D)
    assert jnp.allclose(out_bf16.astype(jnp.float32), ref_bf16,
                        atol=1e-1, rtol=1e-1), "bf16 mismatch vs reference"

    print("KERNEL_OK")
</pallas_src>

<mosaic_0001>
module attributes {stable_mosaic.version = 11 : i64} {
  func.func @_kernel_single(%arg0: i32, %arg1: i32, %arg2: memref<16x32xf32, #tpu.memory_space<vmem>>, %arg3: memref<32x32xf32, #tpu.memory_space<vmem>>, %arg4: memref<1x32xf32, #tpu.memory_space<vmem>>, %arg5: memref<16x32xf32, #tpu.memory_space<vmem>>) attributes {dimension_semantics = [#tpu.dimension_semantics<parallel>, #tpu.dimension_semantics<arbitrary>], iteration_bounds = array<i64: 1, 1>, scalar_prefetch = 0 : i64, scratch_operands = 0 : i64, tpu.core_type = #tpu.core_type<tc>, window_params = [{transform_indices = @transform_0, window_bounds = array<i64: 16, 32>}, {transform_indices = @transform_1, window_bounds = array<i64: 32, 32>}, {transform_indices = @transform_2, window_bounds = array<i64: 1, 32>}, {transform_indices = @transform_3, window_bounds = array<i64: 16, 32>}]} {
    %c0 = arith.constant 0 : index
    %c0_0 = arith.constant 0 : index
    %0 = vector.load %arg2[%c0, %c0_0] : memref<16x32xf32, #tpu.memory_space<vmem>>, vector<16x32xf32>
    %cst = arith.constant dense<0.000000e+00> : vector<16xf32>
    %1 = vector.multi_reduction <add>, %0, %cst [1] : vector<16x32xf32> to vector<16xf32>
    %2 = vector.shape_cast %1 : vector<16xf32> to vector<16x1xf32>
    %cst_1 = arith.constant 3.125000e-02 : f32
    %3 = vector.broadcast %cst_1 : f32 to vector<16x1xf32>
    %4 = arith.mulf %2, %3 : vector<16x1xf32>
    %5 = vector.broadcast %4 : vector<16x1xf32> to vector<16x32xf32>
    %6 = arith.subf %0, %5 : vector<16x32xf32>
    %7 = arith.mulf %6, %6 : vector<16x32xf32>
    %cst_2 = arith.constant dense<0.000000e+00> : vector<16xf32>
    %8 = vector.multi_reduction <add>, %7, %cst_2 [1] : vector<16x32xf32> to vector<16xf32>
    %9 = vector.shape_cast %8 : vector<16xf32> to vector<16x1xf32>
    %cst_3 = arith.constant 3.125000e-02 : f32
    %10 = vector.broadcast %cst_3 : f32 to vector<16x1xf32>
    %11 = arith.mulf %9, %10 : vector<16x1xf32>
    %cst_4 = arith.constant 9.99999974E-6 : f32
    %12 = vector.broadcast %cst_4 : f32 to vector<16x1xf32>
    %13 = arith.addf %11, %12 : vector<16x1xf32>
    %14 = math.rsqrt %13 : vector<16x1xf32>
    %15 = vector.broadcast %14 : vector<16x1xf32> to vector<16x32xf32>
    %16 = arith.mulf %6, %15 : vector<16x32xf32>
    %c0_5 = arith.constant 0 : index
    %c0_6 = arith.constant 0 : index
    %17 = vector.load %arg3[%c0_5, %c0_6] : memref<32x32xf32, #tpu.memory_space<vmem>>, vector<32x32xf32>
    %cst_7 = arith.constant dense<0.000000e+00> : vector<16x32xf32>
    %18 = tpu.matmul %16, %17, %cst_7 {dimension_numbers = #tpu.dot_dimension_numbers<[1], [0], [0], [1], [0, 0, 1, 1], [], []>} : vector<16x32xf32>, vector<32x32xf32>, vector<16x32xf32> -> vector<16x32xf32>
    %c0_8 = arith.constant 0 : index
    %c0_9 = arith.constant 0 : index
    %19 = vector.load %arg4[%c0_8, %c0_9] : memref<1x32xf32, #tpu.memory_space<vmem>>, vector<1x32xf32>
    %20 = vector.broadcast %19 : vector<1x32xf32> to vector<16x32xf32>
    %21 = arith.addf %18, %20 : vector<16x32xf32>
    %c0_10 = arith.constant 0 : index
    %c0_11 = arith.constant 0 : index
    %22 = vector.load %arg5[%c0_10, %c0_11] : memref<16x32xf32, #tpu.memory_space<vmem>>, vector<16x32xf32>
    tpu.vector_store %arg5[%c0_10, %c0_11], %21 {strides = array<i32>} : memref<16x32xf32, #tpu.memory_space<vmem>>, vector<16x32xf32>,
    return
  }
  func.func @transform_0(%arg0: i32, %arg1: i32) -> (i32, i32) {
    %c0_i32 = arith.constant 0 : i32
    %c0_i32_0 = arith.constant 0 : i32
    return %arg0, %c0_i32 : i32, i32
  }
  func.func @transform_1(%arg0: i32, %arg1: i32) -> (i32, i32) {
    %c0_i32 = arith.constant 0 : i32
    %c0_i32_0 = arith.constant 0 : i32
    return %c0_i32, %arg1 : i32, i32
  }
  func.func @transform_2(%arg0: i32, %arg1: i32) -> (i32, i32) {
    %c0_i32 = arith.constant 0 : i32
    %c0_i32_0 = arith.constant 0 : i32
    return %c0_i32, %arg1 : i32, i32
  }
  func.func @transform_3(%arg0: i32, %arg1: i32) -> (i32, i32) {
    %c0_i32 = arith.constant 0 : i32
    return %arg0, %arg1 : i32, i32
  }
}

</mosaic_0001>

<llo_original>
// kernel: prenorm_linear.1
$region0: #{prenorm_linear.1}
  #allocation0 [shape = 'u32[]', space=smem, size = 0x4, offset = 0x4, fixed_abs, tag = 'smem constant byte address 0x4 - core index']
  #allocation1 [shape = 'u32[72,128]{1,0:T(1,128)}', space=vmem, size = 0x9000, scoped, tag = 'internal scratch']
  %s0 = inlined_call_operand.vmem [shape: f32[16,32], index: 0, kind: input, shape index: {}]
  %s1 = inlined_call_operand.vmem [shape: f32[32,32], index: 1, kind: input, shape index: {}]
  %s2 = inlined_call_operand.vmem [shape: f32[1,32], index: 2, kind: input, shape index: {}]
  %s3 = inlined_call_operand.hbm [shape: f32[16,32], index: 3, kind: output, shape index: {}]
  %s4 = sld [smem:[#allocation0]]
  $region22: #{prenorm_linear.1} parent=0
    _
  %s6 = ssub.s32 1, %s4
  %s7 = scalar_select 0, %s6, %s4
  $region1: #{prenorm_linear.1} parent=0
    #allocation2 [shape = 'u8[8192]{0}', space=vmem, size = 0x2000, scoped, tag = 'output window, operand 0, single buffered']
    #allocation3 [shape = 's32[1]{0}', space=sflag, size = 0x4, scoped, tag = 'scoped memory for prenorm_linear.1']
    %8 = vsyncpa [#allocation3], 0
    // Predicated region
    $region2: #{prenorm_linear.1} parent=1 // pred_check
      _
    $region3: #{prenorm_linear.1} parent=1 // pred_check_branch
      %10 = sbr.rel (0) target = $region5
    $region4: #{prenorm_linear.1} parent=1 // pred_region
      _
    $region5: #{prenorm_linear.1} parent=1 // pred_fallthru
      _
    // Predicated region
    $region6: #{prenorm_linear.1} parent=1 // pred_check
      _
    $region7: #{prenorm_linear.1} parent=1 // pred_check_branch
      %12 = sbr.rel (0) target = $region9
    $region8: #{prenorm_linear.1} parent=1 // pred_region
      _
    $region9: #{prenorm_linear.1} parent=1 // pred_fallthru
      _
    // Predicated region
    $region10: #{prenorm_linear.1} parent=1 // pred_check
      _
    $region11: #{prenorm_linear.1} parent=1 // pred_check_branch
      %14 = sbr.rel (0) target = $region13
    $region12: #{prenorm_linear.1} parent=1 // pred_region
      _
    $region13: #{prenorm_linear.1} parent=1 // pred_fallthru
      _
    %v15 = vld [vmem:[%s0] sm:$0xff]
    %v16 = vld [vmem:[%s0 + $0x8] sm:$0xff]
    %vm17 = vcmask 261120
    %v18 = vsel %vm17, %v15, 0.0
    %19 = vadd.xlane.f32.xlu0 %v18
    %v20 = vpop.xlane.xlu0 %19
    %v21 = vsel %vm17, %v16, 0.0
    %22 = vadd.xlane.f32.xlu0 %v21
    %v23 = vpop.xlane.xlu0 %22
    %v24 = vmul.f32 %v20, 0.03125
    %v25 = vmul.f32 %v23, 0.03125
    %v26 = vsub.f32 %v15, %v24
    %v27 = vsub.f32 %v16, %v25
    %v28 = vmul.f32 %v26, %v26
    %v29 = vmul.f32 %v27, %v27
    %v30 = vsel %vm17, %v28, 0.0
    %31 = vadd.xlane.f32.xlu0 %v30
    %v32 = vpop.xlane.xlu0 %31
    %v33 = vsel %vm17, %v29, 0.0
    %34 = vadd.xlane.f32.xlu0 %v33
    %v35 = vpop.xlane.xlu0 %34
    %v36 = vmul.f32 %v32, 0.03125
    %v37 = vmul.f32 %v35, 0.03125
    %v38 = vadd.f32 %v36, 1e-05
    %v39 = vadd.f32 %v37, 1e-05
    %v40 = vrsqrt.pop %v38
    %v41 = vmul.f32 %v40, %v38
    %v42 = vmul.f32 %v41, %v40
    %v43 = vmul.f32 0.5, %v42
    %v44 = vsub.f32 1.5, %v43
    %v45 = vmul.f32 %v40, %v44
    %vm46 = vweird.f32 %v38
    %vm47 = vweird.f32 %v40
    %vm48 = vmor %vm46, %vm47
    %v49 = vsel %vm48, %v40, %v45
    %v50 = vrsqrt.pop %v39
    %v51 = vmul.f32 %v50, %v39
    %v52 = vmul.f32 %v51, %v50
    %v53 = vmul.f32 0.5, %v52
    %v54 = vsub.f32 1.5, %v53
    %v55 = vmul.f32 %v50, %v54
    %vm56 = vweird.f32 %v39
    %vm57 = vweird.f32 %v50
    %vm58 = vmor %vm56, %vm57
    %v59 = vsel %vm58, %v50, %v55
    %v60 = vmul.f32 %v26, %v49
    %v61 = vmul.f32 %v27, %v59
    %v62 = vld [vmem:[%s1] sm:$0xff]
    %v63 = vld [vmem:[%s1 + $0x8] sm:$0xff]
    %v64 = vld [vmem:[%s1 + $0x10] sm:$0xff]
    %v65 = vld [vmem:[%s1 + $0x18] sm:$0xff]
    %v66 = vld [vmem:[%s2] sm:$0x1]
    %v68 = vperm.slane %v66, 0
    %v71 = vsel %vm17, %v60, 0
    %v74 = vsel %vm17, %v61, 0
    %76 = vmatpush.msra.mxu0 0.0
    %77 = vmatpush.msra.mxu0 0.0
    %78 = vmatpush.msra.mxu0 0.0
    %79 = vmatpush.msra.mxu0 0.0
    %80 = vmatpush.msra.mxu0 0.0
    %81 = vmatpush.msra.mxu0 0.0
    %82 = vmatpush.msra.mxu0 0.0
    %83 = vmatpush.msra.mxu0 0.0
    %84 = vmatpush.msra.mxu0 0.0
    %85 = vmatpush.msra.mxu0 0.0
    %86 = vmatpush.msra.mxu0 0.0
    %87 = vmatpush.msra.mxu0 0.0
    %88 = vmatpush.msra.mxu0 %v65
    %89 = vmatpush.msra.mxu0 %v64
    %90 = vmatpush.msra.mxu0 %v63
    %91 = vmatpush.msra.mxu0 %v62
    %92 = vmatmul.f32.gmra.mxu0 %v71
    %v93 = vpop.f32.mrf.mxu0
    %v94 = vadd.f32 %v68, %v93
    %95 = vmatmul.f32.gmra.mxu0 %v74
    %v96 = vpop.f32.mrf.mxu0
    %v97 = vadd.f32 %v68, %v96
    %98 = vdwg.mxu0
    %99 = vst.msk [vmem:[#allocation2] sm:$0xff] %vm17, %v94
    %100 = vst.msk [vmem:[#allocation2 + $0x8] sm:$0xff] %vm17, %v97
    // Predicated region
    $region14: #{prenorm_linear.1} parent=1 // pred_check
      _
    $region15: #{prenorm_linear.1} parent=1 // pred_check_branch
      %102 = sbr.rel (0) target = $region17
    $region16: #{prenorm_linear.1} parent=1 // pred_region
      %104 = vsyncadd [#allocation3], 0
      %s105 = sshll.u32 [#allocation2], 4
      %s106 = int_to_ptr.vmem [resolvable:$true] %s105
      %s107 = sshll.u32 %s3, 4
      %s108 = int_to_ptr.hbm [resolvable:$true] %s107
      %113 = dma.vmem_to_hbm [thread:$0]  %s106, 256, %s108, [#allocation3], 128, 128, 8
    $region17: #{prenorm_linear.1} parent=1 // pred_fallthru
      _
    // Predicated region
    $region18: #{prenorm_linear.1} parent=1 // pred_check
      _
    $region19: #{prenorm_linear.1} parent=1 // pred_check_branch
      %115 = sbr.rel (0) target = $region21
    $region20: #{prenorm_linear.1} parent=1 // pred_region
      %117 = dma.done [#allocation3], 256
    $region21: #{prenorm_linear.1} parent=1 // pred_fallthru
      _
    %118 = vsyncpa [#allocation3], 1

</llo_original>
